<compile_context>
chip_gen: v7x
topology: tpu7x:2x2x1
jax: 0.10.0
libtpu: 0.0.40
codegen_flags: <defaults>
</compile_context>

<pallas_src>
import functools

import jax
import jax.numpy as jnp
from jax.experimental import pallas as pl
from jax.experimental.pallas import tpu as pltpu


def _round_up(x, m):
    return ((x + m - 1) // m) * m


def _gap_kernel(x_ref, o_ref, acc_ref, *, inv_s):
    # x_ref:  (TR, TS) input tile
    # o_ref:  (TR, 1)  output tile (resident across the S grid axis)
    # acc_ref:(TR, 1)  f32 running sum scratch
    sj = pl.program_id(1)

    @pl.when(sj == 0)
    def _():
        acc_ref[...] = jnp.zeros_like(acc_ref)

    # Accumulate in f32 without materializing a full f32 copy of the tile.
    acc_ref[...] += jnp.sum(x_ref[...], axis=-1, keepdims=True,
                            dtype=jnp.float32)

    @pl.when(sj == pl.num_programs(1) - 1)
    def _():
        o_ref[...] = (acc_ref[...] * inv_s).astype(o_ref.dtype)


def global_avg_pool_3d(x, *, tr=None, ts=None):
    """x: (N, C, D, H, W) -> (N, C, 1), matching
    F.adaptive_avg_pool3d(x, 1).view(N, C, -1)."""
    n, c, d, h, w = x.shape
    s = d * h * w
    nc = n * c
    x2 = x.reshape(nc, s)  # glue reshape in plain JAX

    # Sublane packing granularity for the input dtype (f32: 8, bf16: 16, i8: 32).
    itemsize = jnp.dtype(x.dtype).itemsize
    sub = {4: 8, 2: 16, 1: 32}.get(itemsize, 8)

    # Row tile: multiple of sublane packing, capped at 256.
    if tr is None:
        tr = min(256, _round_up(nc, sub))
    tr = max(sub, (tr // sub) * sub)

    # Reduction tile: multiple of 128 lanes, capped at 8192.
    # Worst case VMEM: 2 (double-buffer) * 256 * 8192 * 4B = 16 MiB  -> fits the
    # default 32 MiB scoped VMEM on v5e/v6e and v7x alike.
    if ts is None:
        ts = min(8192, _round_up(s, 128))
    ts = max(128, (ts // 128) * 128)

    nc_pad = _round_up(nc, tr)
    s_pad = _round_up(s, ts)
    if (nc_pad, s_pad) != (nc, s):
        # Zero padding: sum unchanged; we divide by the true S below.
        x2 = jnp.pad(x2, ((0, nc_pad - nc), (0, s_pad - s)))

    grid = (nc_pad // tr, s_pad // ts)
    kernel = functools.partial(_gap_kernel, inv_s=float(1.0 / s))

    out = pl.pallas_call(
        kernel,
        out_shape=jax.ShapeDtypeStruct((nc_pad, 1), x.dtype),
        grid_spec=pltpu.PrefetchScalarGridSpec(
            num_scalar_prefetch=0,
            grid=grid,
            in_specs=[pl.BlockSpec((tr, ts), lambda i, j: (i, j))],
            out_specs=pl.BlockSpec((tr, 1), lambda i, j: (i, 0)),
            scratch_shapes=[pltpu.VMEM((tr, 1), jnp.float32)],
        ),
        compiler_params=pltpu.CompilerParams(
            dimension_semantics=("parallel", "arbitrary"),
        ),
    )(x2)

    return out[:nc].reshape(n, c, 1)


if __name__ == "__main__":
    key = jax.random.PRNGKey(0)
    k0, k1 = jax.random.split(key)

    # Small shapes consistent with a 3D feature map: N=2, C=4, D=H=W=8
    N, C, D, H, W = 2, 4, 8, 8, 8
    x = jax.random.normal(k0, (N, C, D, H, W), dtype=jnp.float32)
    y = jax.block_until_ready(global_avg_pool_3d(x))
    ref = jnp.mean(x.reshape(N, C, -1), axis=-1, keepdims=True)
    assert y.shape == (N, C, 1), y.shape
    assert jnp.allclose(y, ref, atol=1e-5, rtol=1e-5)

    # Non-aligned shape to exercise the row/lane padding path.
    N2, C2, D2, H2, W2 = 2, 3, 5, 6, 7
    x2 = jax.random.normal(k1, (N2, C2, D2, H2, W2), dtype=jnp.float32)
    y2 = jax.block_until_ready(global_avg_pool_3d(x2))
    ref2 = jnp.mean(x2.reshape(N2, C2, -1), axis=-1, keepdims=True)
    assert y2.shape == (N2, C2, 1), y2.shape
    assert jnp.allclose(y2, ref2, atol=1e-5, rtol=1e-5)

    print("KERNEL_OK")
</pallas_src>

<mosaic_0001>
module attributes {stable_mosaic.version = 11 : i64} {
  func.func @_gap_kernel(%arg0: i32, %arg1: i32, %arg2: memref<8x512xf32, #tpu.memory_space<vmem>>, %arg3: memref<8x1xf32, #tpu.memory_space<vmem>>, %arg4: memref<8x1xf32, #tpu.memory_space<vmem>>) attributes {dimension_semantics = [#tpu.dimension_semantics<parallel>, #tpu.dimension_semantics<arbitrary>], iteration_bounds = array<i64: 1, 1>, scalar_prefetch = 0 : i64, scratch_operands = 1 : i64, tpu.core_type = #tpu.core_type<tc>, window_params = [{transform_indices = @transform_0, window_bounds = array<i64: 8, 512>}, {transform_indices = @transform_1, window_bounds = array<i64: 8, 1>}]} {
    %c0_i32 = arith.constant 0 : i32
    %0 = arith.cmpi eq, %arg1, %c0_i32 : i32
    %1 = arith.extui %0 : i1 to i32
    %c0_i32_0 = arith.constant 0 : i32
    %2 = arith.cmpi ne, %1, %c0_i32_0 : i32
    scf.if %2 {
      %cst_8 = arith.constant 0.000000e+00 : f32
      %12 = vector.broadcast %cst_8 : f32 to vector<8x1xf32>
      %c0_9 = arith.constant 0 : index
      %c0_10 = arith.constant 0 : index
      %13 = vector.load %arg4[%c0_9, %c0_10] : memref<8x1xf32, #tpu.memory_space<vmem>>, vector<8x1xf32>
      tpu.vector_store %arg4[%c0_9, %c0_10], %12 {strides = array<i32>} : memref<8x1xf32, #tpu.memory_space<vmem>>, vector<8x1xf32>,
    } else {
    }
    %c0 = arith.constant 0 : index
    %c0_1 = arith.constant 0 : index
    %3 = vector.load %arg4[%c0, %c0_1] : memref<8x1xf32, #tpu.memory_space<vmem>>, vector<8x1xf32>
    %c0_2 = arith.constant 0 : index
    %c0_3 = arith.constant 0 : index
    %4 = vector.load %arg2[%c0_2, %c0_3] : memref<8x512xf32, #tpu.memory_space<vmem>>, vector<8x512xf32>
    %cst = arith.constant dense<0.000000e+00> : vector<8xf32>
    %5 = vector.multi_reduction <add>, %4, %cst [1] : vector<8x512xf32> to vector<8xf32>
    %6 = vector.shape_cast %5 : vector<8xf32> to vector<8x1xf32>
    %7 = arith.addf %3, %6 : vector<8x1xf32>
    %c0_4 = arith.constant 0 : index
    %c0_5 = arith.constant 0 : index
    %8 = vector.load %arg4[%c0_4, %c0_5] : memref<8x1xf32, #tpu.memory_space<vmem>>, vector<8x1xf32>
    tpu.vector_store %arg4[%c0_4, %c0_5], %7 {strides = array<i32>} : memref<8x1xf32, #tpu.memory_space<vmem>>, vector<8x1xf32>,
    %c0_i32_6 = arith.constant 0 : i32
    %9 = arith.cmpi eq, %arg1, %c0_i32_6 : i32
    %10 = arith.extui %9 : i1 to i32
    %c0_i32_7 = arith.constant 0 : i32
    %11 = arith.cmpi ne, %10, %c0_i32_7 : i32
    scf.if %11 {
      %c0_8 = arith.constant 0 : index
      %c0_9 = arith.constant 0 : index
      %12 = vector.load %arg4[%c0_8, %c0_9] : memref<8x1xf32, #tpu.memory_space<vmem>>, vector<8x1xf32>
      %cst_10 = arith.constant 0.001953125 : f32
      %13 = vector.broadcast %cst_10 : f32 to vector<8x1xf32>
      %14 = arith.mulf %12, %13 : vector<8x1xf32>
      %c0_11 = arith.constant 0 : index
      %c0_12 = arith.constant 0 : index
      %15 = vector.load %arg3[%c0_11, %c0_12] : memref<8x1xf32, #tpu.memory_space<vmem>>, vector<8x1xf32>
      tpu.vector_store %arg3[%c0_11, %c0_12], %14 {strides = array<i32>} : memref<8x1xf32, #tpu.memory_space<vmem>>, vector<8x1xf32>,
    } else {
    }
    return
  }
  func.func @transform_0(%arg0: i32, %arg1: i32) -> (i32, i32) {
    %c0_i32 = arith.constant 0 : i32
    return %arg0, %arg1 : i32, i32
  }
  func.func @transform_1(%arg0: i32, %arg1: i32) -> (i32, i32) {
    %c0_i32 = arith.constant 0 : i32
    %c0_i32_0 = arith.constant 0 : i32
    return %arg0, %c0_i32 : i32, i32
  }
}

</mosaic_0001>

<llo_original>
// kernel: tpu_custom_call.1
$region0: #{tpu_custom_call.1}
  #allocation0 [shape = 'u32[]', space=smem, size = 0x4, offset = 0x4, fixed_abs, tag = 'smem constant byte address 0x4 - core index']
  #allocation1 [shape = 'u32[144,128]{1,0:T(1,128)}', space=vmem, size = 0x12000, scoped, tag = 'internal scratch']
  #allocation2 [shape = 'f32[8,1]{1,0:T(8,128)}', space=vmem, size = 0x1000, scoped, tag = 'scratch operand']
  %s0 = inlined_call_operand.hbm [shape: f32[8,512], index: 0, kind: input, shape index: {}]
  %s1 = inlined_call_operand.vmem [shape: f32[8,1], index: 1, kind: output, shape index: {}]
  %s2 = sld [smem:[#allocation0]]
  $region26: #{tpu_custom_call.1} parent=0
    _
  %s4 = ssub.s32 1, %s2
  %s5 = scalar_select 0, %s4, %s2
  $region1: #{tpu_custom_call.1} parent=0
    #allocation3 [shape = 'u8[16384]{0}', space=vmem, size = 0x4000, scoped, tag = 'input window, operand 0, single buffered']
    #allocation4 [shape = 's32[1]{0}', space=sflag, size = 0x4, scoped, tag = 'scoped memory for tpu_custom_call.1']
    %6 = vsyncpa [#allocation4], 0
    // Predicated region
    $region2: #{tpu_custom_call.1} parent=1 // pred_check
      _
    $region3: #{tpu_custom_call.1} parent=1 // pred_check_branch
      %8 = sbr.rel (0) target = $region5
    $region4: #{tpu_custom_call.1} parent=1 // pred_region
      %s10 = ssub.s32 512, 512
      %11 = vsyncadd [#allocation4], %s10
      %s13 = sshll.u32 [#allocation3], 4
      %s14 = int_to_ptr.vmem [resolvable:$true] %s13
      %16 = dma.hbm_to_vmem [thread:$0]  %s0, 512, %s14, [#allocation4]
    $region5: #{tpu_custom_call.1} parent=1 // pred_fallthru
      _
    // Predicated region
    $region6: #{tpu_custom_call.1} parent=1 // pred_check
      _
    $region7: #{tpu_custom_call.1} parent=1 // pred_check_branch
      %18 = sbr.rel (0) target = $region9
    $region8: #{tpu_custom_call.1} parent=1 // pred_region
      %19 = dma.done [#allocation4], 512
    $region9: #{tpu_custom_call.1} parent=1 // pred_fallthru
      _
    %p20 = scmp.eq.s32.totalorder 0, 0
    // Predicated region
    $region10: #{tpu_custom_call.1} parent=1 // pred_check
      %p21 = pneg %p20
    $region11: #{tpu_custom_call.1} parent=1 // pred_check_branch
      %23 = sbr.rel (%p21) target = $region13
    $region12: #{tpu_custom_call.1} parent=1 // pred_region
      %vm24 = vcmask 7168
      %25 = vst.msk [vmem:[#allocation2] sm:$0xff] %vm24, 0.0
    $region13: #{tpu_custom_call.1} parent=1 // pred_fallthru
      _
    %v26 = vld [vmem:[#allocation2] sm:$0xff]
    %v27 = vld [vmem:[#allocation3] sm:$0xff]
    %v28 = vld [vmem:[#allocation3 + $0x8] sm:$0xff]
    %v29 = vld [vmem:[#allocation3 + $0x10] sm:$0xff]
    %v30 = vld [vmem:[#allocation3 + $0x18] sm:$0xff]
    %v31 = vadd.f32 %v27, %v28
    %v32 = vadd.f32 %v31, %v29
    %v33 = vadd.f32 %v32, %v30
    %34 = vadd.xlane.f32.xlu0 %v33
    %v35 = vpop.xlane.xlu0 %34
    %v36 = vadd.f32 %v26, %v35
    %vm37 = vcmask 7168
    %38 = vst.msk [vmem:[#allocation2] sm:$0xff] %vm37, %v36
    // Predicated region
    $region14: #{tpu_custom_call.1} parent=1 // pred_check
      %p39 = pneg %p20
    $region15: #{tpu_custom_call.1} parent=1 // pred_check_branch
      %41 = sbr.rel (%p39) target = $region17
    $region16: #{tpu_custom_call.1} parent=1 // pred_region
      %v42 = vld [vmem:[#allocation2] sm:$0xff]
      %v43 = vmul.f32 %v42, 0.001953125
      %44 = vst.msk [vmem:[%s1] sm:$0xff] %vm37, %v43
    $region17: #{tpu_custom_call.1} parent=1 // pred_fallthru
      _
    // Predicated region
    $region18: #{tpu_custom_call.1} parent=1 // pred_check
      _
    $region19: #{tpu_custom_call.1} parent=1 // pred_check_branch
      %46 = sbr.rel (0) target = $region21
    $region20: #{tpu_custom_call.1} parent=1 // pred_region
      _
    $region21: #{tpu_custom_call.1} parent=1 // pred_fallthru
      _
    // Predicated region
    $region22: #{tpu_custom_call.1} parent=1 // pred_check
      _
    $region23: #{tpu_custom_call.1} parent=1 // pred_check_branch
      %48 = sbr.rel (0) target = $region25
    $region24: #{tpu_custom_call.1} parent=1 // pred_region
      _
    $region25: #{tpu_custom_call.1} parent=1 // pred_fallthru
      _
    %49 = vsyncpa [#allocation4], 1

</llo_original>
